<compile_context>
chip_gen: v7x
topology: tpu7x:2x2x1
jax: 0.10.0
libtpu: 0.0.40
codegen_flags: <defaults>
</compile_context>

<pallas_src>
import jax
import jax.numpy as jnp
from jax.experimental import pallas as pl
from jax.experimental.pallas import tpu as pltpu


def _round_up(n, m):
    return ((n + m - 1) // m) * m


def mlp_kernel(x_ref, w1_ref, b1_ref, w2_ref, b2_ref, w3_ref, b3_ref, o_ref):
    """One (TM, d_in) batch tile of the fused 2-hidden-layer MLP forward.

    h1 = relu(x @ W1 + b1)
    h2 = relu(h1 @ W2 + b2)
    # nn.Dropout() is identity at inference time (intentionally omitted).
    y  = sigmoid(h2 @ W3 + b3)
    """
    x = x_ref[...].astype(jnp.bfloat16)            # f32 HBM read, bf16 for MXU

    h1 = jnp.dot(x, w1_ref[...], preferred_element_type=jnp.float32)
    h1 = jnp.maximum(h1 + b1_ref[...], 0.0)        # f32 epilogue (v5e-friendly)

    h2 = jnp.dot(h1.astype(jnp.bfloat16), w2_ref[...],
                 preferred_element_type=jnp.float32)
    h2 = jnp.maximum(h2 + b2_ref[...], 0.0)

    # TODO(synk): nn.Dropout() is only active in training mode; this forward
    # is inference, so dropout is the identity and is intentionally omitted.

    logits = jnp.dot(h2.astype(jnp.bfloat16), w3_ref[...],
                     preferred_element_type=jnp.float32)
    o_ref[...] = jax.nn.sigmoid(logits + b3_ref[...])   # f32, unpadded store


def prepare_params(params):
    """One-time weight/bias preparation (hoisted out of the per-call path):
    bf16 weights (in, out), f32 (1, out) biases."""
    prepared = []
    for w, b in params:
        prepared.append((jnp.asarray(w, jnp.bfloat16),
                         jnp.asarray(b, jnp.float32).reshape(1, -1)))
    return tuple(prepared)


def _choose_tile(batch, *, n_cores=2, max_tile=1024):
    """Biggest-tile-that-fits heuristic: 512-1024 rows for large batches,
    >=2 grid steps when possible (v7x megacore), never balloons a tiny batch."""
    per_core = pl.cdiv(batch, n_cores)
    tm = min(max_tile, _round_up(max(per_core, 1), 8))
    return max(tm, 8)


def mlp_forward(x, prepared_params, *, tile_m=None):
    """Pallas MLP forward. x: (B, input_size) f32. Returns (B, output_size) f32."""
    (w1, b1), (w2, b2), (w3, b3) = prepared_params
    B, d_in = x.shape
    out_dim = w3.shape[1]

    tm = tile_m if tile_m is not None else _choose_tile(B)
    b_p = _round_up(B, tm)
    n_tiles = b_p // tm

    # Pad the batch axis only (zeros), and only when needed.  No lane padding,
    # no dtype conversion pass over x in the wrapper.
    x_in = x if b_p == B else jnp.pad(x, ((0, b_p - B), (0, 0)))

    def resident(a):  # weights/biases: same block every grid step -> stay in VMEM
        return pl.BlockSpec(a.shape, lambda i: (0, 0))

    y = pl.pallas_call(
        mlp_kernel,
        out_shape=jax.ShapeDtypeStruct((b_p, out_dim), jnp.float32),
        grid=(n_tiles,),
        in_specs=[
            pl.BlockSpec((tm, d_in), lambda i: (i, 0)),   # x: batch-tiled, unpadded
            resident(w1), resident(b1),
            resident(w2), resident(b2),
            resident(w3), resident(b3),
        ],
        out_specs=pl.BlockSpec((tm, out_dim), lambda i: (i, 0)),  # unpadded output
        compiler_params=pltpu.CompilerParams(
            dimension_semantics=("parallel",),
        ),
    )(x_in, w1, b1, w2, b2, w3, b3)

    return y if b_p == B else y[:B]


def init_params(key, input_size, hidden_sizes, output_size):
    """Deterministic Linear params (PyTorch default-style uniform init),
    weights stored transposed as (in, out), f32."""
    params = []
    sizes = [input_size] + list(hidden_sizes) + [output_size]
    for fan_in, fan_out in zip(sizes[:-1], sizes[1:]):
        key, kw, kb = jax.random.split(key, 3)
        bound = 1.0 / jnp.sqrt(float(fan_in))
        w = jax.random.uniform(kw, (fan_in, fan_out), jnp.float32, -bound, bound)
        b = jax.random.uniform(kb, (fan_out,), jnp.float32, -bound, bound)
        params.append((w, b))
    return params


def mlp_reference(x, params):
    """Pure-JAX reference emulating the kernel's bf16-matmul / f32-accumulate path."""
    (w1, b1), (w2, b2), (w3, b3) = params

    def mm(a, w):
        return jnp.dot(a.astype(jnp.bfloat16), w.astype(jnp.bfloat16),
                       preferred_element_type=jnp.float32)

    h = jnp.maximum(mm(x, w1) + b1, 0.0)
    h = jnp.maximum(mm(h, w2) + b2, 0.0)
    return jax.nn.sigmoid(mm(h, w3) + b3)


if __name__ == "__main__":
    # Shapes consistent with the module: input_size=32, hidden=[64, 32], out=8.
    input_size = 32
    hidden_sizes = (64, 32)
    output_size = 8

    key = jax.random.PRNGKey(0)
    key, kx1, kx2 = jax.random.split(key, 3)
    params = init_params(key, input_size, hidden_sizes, output_size)
    prepared = prepare_params(params)   # one-time bf16 cast / bias reshape

    # Larger batch: 2 batch tiles of 128 (shards across both v7x TensorCores).
    x_big = jax.random.normal(kx1, (256, input_size), jnp.float32)
    y_big = mlp_forward(x_big, prepared)
    jax.block_until_ready(y_big)
    assert y_big.shape == (256, output_size)
    assert jnp.allclose(y_big, mlp_reference(x_big, params), atol=1e-4, rtol=1e-4), \
        "mismatch vs reference (B=256)"

    # Small-batch path: tile shrinks to the batch, no padded rows ballooning.
    x_small = jax.random.normal(kx2, (8, input_size), jnp.float32)
    y_small = mlp_forward(x_small, prepared)
    jax.block_until_ready(y_small)
    assert y_small.shape == (8, output_size)
    assert jnp.allclose(y_small, mlp_reference(x_small, params), atol=1e-4, rtol=1e-4), \
        "mismatch vs reference (B=8)"

    print("KERNEL_OK")
</pallas_src>

<mosaic_0001>
module attributes {stable_mosaic.version = 11 : i64} {
  func.func @mlp_kernel(%arg0: i32, %arg1: memref<128x32xf32, #tpu.memory_space<vmem>>, %arg2: memref<32x64xbf16, #tpu.memory_space<vmem>>, %arg3: memref<1x64xf32, #tpu.memory_space<vmem>>, %arg4: memref<64x32xbf16, #tpu.memory_space<vmem>>, %arg5: memref<1x32xf32, #tpu.memory_space<vmem>>, %arg6: memref<32x8xbf16, #tpu.memory_space<vmem>>, %arg7: memref<1x8xf32, #tpu.memory_space<vmem>>, %arg8: memref<128x8xf32, #tpu.memory_space<vmem>>) attributes {dimension_semantics = [#tpu.dimension_semantics<parallel>], iteration_bounds = array<i64: 2>, scalar_prefetch = 0 : i64, scratch_operands = 0 : i64, tpu.core_type = #tpu.core_type<tc>, window_params = [{transform_indices = @transform_0, window_bounds = array<i64: 128, 32>}, {pipeline_mode = #tpu.pipeline_mode<synchronous>, transform_indices = @transform_1, window_bounds = array<i64: 32, 64>}, {pipeline_mode = #tpu.pipeline_mode<synchronous>, transform_indices = @transform_2, window_bounds = array<i64: 1, 64>}, {pipeline_mode = #tpu.pipeline_mode<synchronous>, transform_indices = @transform_3, window_bounds = array<i64: 64, 32>}, {pipeline_mode = #tpu.pipeline_mode<synchronous>, transform_indices = @transform_4, window_bounds = array<i64: 1, 32>}, {pipeline_mode = #tpu.pipeline_mode<synchronous>, transform_indices = @transform_5, window_bounds = array<i64: 32, 8>}, {pipeline_mode = #tpu.pipeline_mode<synchronous>, transform_indices = @transform_6, window_bounds = array<i64: 1, 8>}, {transform_indices = @transform_7, window_bounds = array<i64: 128, 8>}]} {
    %c0 = arith.constant 0 : index
    %c0_0 = arith.constant 0 : index
    %0 = vector.load %arg1[%c0, %c0_0] : memref<128x32xf32, #tpu.memory_space<vmem>>, vector<128x32xf32>
    %1 = arith.truncf %0 : vector<128x32xf32> to vector<128x32xbf16>
    %c0_1 = arith.constant 0 : index
    %c0_2 = arith.constant 0 : index
    %2 = vector.load %arg2[%c0_1, %c0_2] : memref<32x64xbf16, #tpu.memory_space<vmem>>, vector<32x64xbf16>
    %cst = arith.constant dense<0.000000e+00> : vector<128x64xf32>
    %3 = tpu.matmul %1, %2, %cst {dimension_numbers = #tpu.dot_dimension_numbers<[1], [0], [0], [1], [0, 0, 1, 1], [], []>} : vector<128x32xbf16>, vector<32x64xbf16>, vector<128x64xf32> -> vector<128x64xf32>
    %c0_3 = arith.constant 0 : index
    %c0_4 = arith.constant 0 : index
    %4 = vector.load %arg3[%c0_3, %c0_4] : memref<1x64xf32, #tpu.memory_space<vmem>>, vector<1x64xf32>
    %5 = vector.broadcast %4 : vector<1x64xf32> to vector<128x64xf32>
    %6 = arith.addf %3, %5 : vector<128x64xf32>
    %cst_5 = arith.constant 0.000000e+00 : f32
    %7 = vector.broadcast %cst_5 : f32 to vector<128x64xf32>
    %8 = arith.maximumf %6, %7 : vector<128x64xf32>
    %9 = arith.truncf %8 : vector<128x64xf32> to vector<128x64xbf16>
    %c0_6 = arith.constant 0 : index
    %c0_7 = arith.constant 0 : index
    %10 = vector.load %arg4[%c0_6, %c0_7] : memref<64x32xbf16, #tpu.memory_space<vmem>>, vector<64x32xbf16>
    %cst_8 = arith.constant dense<0.000000e+00> : vector<128x32xf32>
    %11 = tpu.matmul %9, %10, %cst_8 {dimension_numbers = #tpu.dot_dimension_numbers<[1], [0], [0], [1], [0, 0, 1, 1], [], []>} : vector<128x64xbf16>, vector<64x32xbf16>, vector<128x32xf32> -> vector<128x32xf32>
    %c0_9 = arith.constant 0 : index
    %c0_10 = arith.constant 0 : index
    %12 = vector.load %arg5[%c0_9, %c0_10] : memref<1x32xf32, #tpu.memory_space<vmem>>, vector<1x32xf32>
    %13 = vector.broadcast %12 : vector<1x32xf32> to vector<128x32xf32>
    %14 = arith.addf %11, %13 : vector<128x32xf32>
    %cst_11 = arith.constant 0.000000e+00 : f32
    %15 = vector.broadcast %cst_11 : f32 to vector<128x32xf32>
    %16 = arith.maximumf %14, %15 : vector<128x32xf32>
    %17 = arith.truncf %16 : vector<128x32xf32> to vector<128x32xbf16>
    %c0_12 = arith.constant 0 : index
    %c0_13 = arith.constant 0 : index
    %18 = vector.load %arg6[%c0_12, %c0_13] : memref<32x8xbf16, #tpu.memory_space<vmem>>, vector<32x8xbf16>
    %cst_14 = arith.constant dense<0.000000e+00> : vector<128x8xf32>
    %19 = tpu.matmul %17, %18, %cst_14 {dimension_numbers = #tpu.dot_dimension_numbers<[1], [0], [0], [1], [0, 0, 1, 1], [], []>} : vector<128x32xbf16>, vector<32x8xbf16>, vector<128x8xf32> -> vector<128x8xf32>
    %c0_15 = arith.constant 0 : index
    %c0_16 = arith.constant 0 : index
    %20 = vector.load %arg7[%c0_15, %c0_16] : memref<1x8xf32, #tpu.memory_space<vmem>>, vector<1x8xf32>
    %21 = vector.broadcast %20 : vector<1x8xf32> to vector<128x8xf32>
    %22 = arith.addf %19, %21 : vector<128x8xf32>
    %23 = arith.negf %22 : vector<128x8xf32>
    %24 = math.exp %23 : vector<128x8xf32>
    %cst_17 = arith.constant 1.000000e+00 : f32
    %25 = vector.broadcast %cst_17 : f32 to vector<128x8xf32>
    %26 = arith.addf %25, %24 : vector<128x8xf32>
    %27 = arith.divf %25, %26 : vector<128x8xf32>
    %c0_18 = arith.constant 0 : index
    %c0_19 = arith.constant 0 : index
    %28 = vector.load %arg8[%c0_18, %c0_19] : memref<128x8xf32, #tpu.memory_space<vmem>>, vector<128x8xf32>
    tpu.vector_store %arg8[%c0_18, %c0_19], %27 {strides = array<i32>} : memref<128x8xf32, #tpu.memory_space<vmem>>, vector<128x8xf32>,
    return
  }
  func.func @transform_0(%arg0: i32) -> (i32, i32) {
    %c0_i32 = arith.constant 0 : i32
    %c0_i32_0 = arith.constant 0 : i32
    return %arg0, %c0_i32 : i32, i32
  }
  func.func @transform_1(%arg0: i32) -> (i32, i32) {
    %c0_i32 = arith.constant 0 : i32
    %c0_i32_0 = arith.constant 0 : i32
    %c0_i32_1 = arith.constant 0 : i32
    return %c0_i32, %c0_i32_0 : i32, i32
  }
  func.func @transform_2(%arg0: i32) -> (i32, i32) {
    %c0_i32 = arith.constant 0 : i32
    %c0_i32_0 = arith.constant 0 : i32
    %c0_i32_1 = arith.constant 0 : i32
    return %c0_i32, %c0_i32_0 : i32, i32
  }
  func.func @transform_3(%arg0: i32) -> (i32, i32) {
    %c0_i32 = arith.constant 0 : i32
    %c0_i32_0 = arith.constant 0 : i32
    %c0_i32_1 = arith.constant 0 : i32
    return %c0_i32, %c0_i32_0 : i32, i32
  }
  func.func @transform_4(%arg0: i32) -> (i32, i32) {
    %c0_i32 = arith.constant 0 : i32
    %c0_i32_0 = arith.constant 0 : i32
    %c0_i32_1 = arith.constant 0 : i32
    return %c0_i32, %c0_i32_0 : i32, i32
  }
  func.func @transform_5(%arg0: i32) -> (i32, i32) {
    %c0_i32 = arith.constant 0 : i32
    %c0_i32_0 = arith.constant 0 : i32
    %c0_i32_1 = arith.constant 0 : i32
    return %c0_i32, %c0_i32_0 : i32, i32
  }
  func.func @transform_6(%arg0: i32) -> (i32, i32) {
    %c0_i32 = arith.constant 0 : i32
    %c0_i32_0 = arith.constant 0 : i32
    %c0_i32_1 = arith.constant 0 : i32
    return %c0_i32, %c0_i32_0 : i32, i32
  }
  func.func @transform_7(%arg0: i32) -> (i32, i32) {
    %c0_i32 = arith.constant 0 : i32
    %c0_i32_0 = arith.constant 0 : i32
    return %arg0, %c0_i32 : i32, i32
  }
}

</mosaic_0001>

<llo_original>
// kernel: tpu_custom_call.1
$region0: #{tpu_custom_call.1}
  #allocation0 [shape = 'u32[]', space=smem, size = 0x4, offset = 0x4, fixed_abs, tag = 'smem constant byte address 0x4 - core index']
  #allocation1 [shape = 'u32[144,128]{1,0:T(1,128)}', space=vmem, size = 0x12000, scoped, tag = 'internal scratch']
  %s0 = inlined_call_operand.vmem [shape: f32[256,32], index: 0, kind: input, shape index: {}]
  %s1 = inlined_call_operand.vmem [shape: bf16[32,64], index: 1, kind: input, shape index: {}]
  %s2 = inlined_call_operand.vmem [shape: f32[1,64], index: 2, kind: input, shape index: {}]
  %s3 = inlined_call_operand.vmem [shape: bf16[64,32], index: 3, kind: input, shape index: {}]
  %s4 = inlined_call_operand.vmem [shape: f32[1,32], index: 4, kind: input, shape index: {}]
  %s5 = inlined_call_operand.vmem [shape: bf16[32,8], index: 5, kind: input, shape index: {}]
  %s6 = inlined_call_operand.vmem [shape: f32[1,8], index: 6, kind: input, shape index: {}]
  %s7 = inlined_call_operand.vmem [shape: f32[256,8], index: 7, kind: output, shape index: {}]
  %s8 = sld [smem:[#allocation0]]
  $region61: #{tpu_custom_call.1} parent=0
    _
  %s10 = ssub.s32 1, %s8
  %s11 = scalar_select 0, %s10, %s8
  loop: start=0, step=1, limit=4
  $region2: #{tpu_custom_call.1} parent=0 // loop_pre_header
    _
  $region3: #{tpu_custom_call.1} parent=0 // loop_header
    %s13 = sphi 0, %s17
    %p14 = scmp.ge.s32.totalorder %s13, 4
    %s23 = sphi 0, %s25
    %s26 = sphi 0, %s23
    %s27 = sphi 0, %s26
    %s43 = sphi 0, %s27
    %s47 = sphi 0, %s47
    %s49 = sphi 0, %s47
    %s50 = sphi 0, %s49
    %s64 = sphi 0, %s50
    %s68 = sphi 0, %s68
    %s70 = sphi 0, %s68
    %s71 = sphi 0, %s70
    %s85 = sphi 0, %s71
    %s89 = sphi 0, %s89
    %s91 = sphi 0, %s89
    %s92 = sphi 0, %s91
    %s106 = sphi 0, %s92
    %s110 = sphi 0, %s110
    %s112 = sphi 0, %s110
    %s113 = sphi 0, %s112
    %s127 = sphi 0, %s113
    %s131 = sphi 0, %s131
    %s133 = sphi 0, %s131
    %s134 = sphi 0, %s133
    %s148 = sphi 0, %s134
    %s152 = sphi 0, %s152
    %s154 = sphi 0, %s152
    %s155 = sphi 0, %s154
    %s169 = sphi 0, %s155
    %s175 = sphi 0, %s177
    %s178 = sphi 0, %s175
    %s179 = sphi 0, %s178
    %s195 = sphi 0, %s179
  $region4: #{tpu_custom_call.1} parent=0 // loop_header_branch
    %16 = sbr.rel (%p14) target = $region8
  $region5: #{tpu_custom_call.1} parent=0 // loop_body
    %s18 = ssub.s32 %s13, 1
    %s19 = ssub.s32 %s13, 2
    %s20 = sadd.s32 %s13, 1
    %s21 = ssub.s32 %s13, %s20
    %p22 = scmp.eq.s32.totalorder %s21, 0
    %s24 = sadd.s32 %s23, 1
    %s25 = scalar_select %p22, %s23, %s24
    %p28 = pneg %p22
    %p29 = scmp.eq.s32.totalorder %s13, 1
    %p30 = por %p28, %p29
    %p31 = scmp.ne.s32.totalorder %s23, %s26
    %p32 = scmp.eq.s32.totalorder %s13, 0
    %p33 = por %p31, %p32
    %p34 = scmp.ne.s32.totalorder %s23, %s26
    %p35 = scmp.eq.s32.totalorder %s18, 1
    %p36 = por %p34, %p35
    %p37 = scmp.ne.s32.totalorder %s26, %s27
    %p38 = scmp.eq.s32.totalorder %s18, 0
    %p39 = por %p37, %p38
    %p40 = scmp.ne.s32.totalorder %s26, %s27
    %p41 = scmp.eq.s32.totalorder %s19, 1
    %p42 = por %p40, %p41
    %p44 = scmp.ne.s32.totalorder %s27, %s43
    %p45 = scmp.eq.s32.totalorder %s19, 0
    %p46 = por %p44, %p45
    %s48 = sadd.s32 %s47, 1
    %p51 = scmp.eq.s32.totalorder %s13, 1
    %p52 = scmp.ne.s32.totalorder %s47, %s49
    %p53 = scmp.eq.s32.totalorder %s13, 0
    %p54 = por %p52, %p53
    %p55 = scmp.ne.s32.totalorder %s47, %s49
    %p56 = scmp.eq.s32.totalorder %s18, 1
    %p57 = por %p55, %p56
    %p58 = scmp.ne.s32.totalorder %s49, %s50
    %p59 = scmp.eq.s32.totalorder %s18, 0
    %p60 = por %p58, %p59
    %p61 = scmp.ne.s32.totalorder %s49, %s50
    %p62 = scmp.eq.s32.totalorder %s19, 1
    %p63 = por %p61, %p62
    %p65 = scmp.ne.s32.totalorder %s50, %s64
    %p66 = scmp.eq.s32.totalorder %s19, 0
    %p67 = por %p65, %p66
    %s69 = sadd.s32 %s68, 1
    %p72 = scmp.eq.s32.totalorder %s13, 1
    %p73 = scmp.ne.s32.totalorder %s68, %s70
    %p74 = scmp.eq.s32.totalorder %s13, 0
    %p75 = por %p73, %p74
    %p76 = scmp.ne.s32.totalorder %s68, %s70
    %p77 = scmp.eq.s32.totalorder %s18, 1
    %p78 = por %p76, %p77
    %p79 = scmp.ne.s32.totalorder %s70, %s71
    %p80 = scmp.eq.s32.totalorder %s18, 0
    %p81 = por %p79, %p80
    %p82 = scmp.ne.s32.totalorder %s70, %s71
    %p83 = scmp.eq.s32.totalorder %s19, 1
    %p84 = por %p82, %p83
    %p86 = scmp.ne.s32.totalorder %s71, %s85
    %p87 = scmp.eq.s32.totalorder %s19, 0
    %p88 = por %p86, %p87
    %s90 = sadd.s32 %s89, 1
    %p93 = scmp.eq.s32.totalorder %s13, 1
    %p94 = scmp.ne.s32.totalorder %s89, %s91
    %p95 = scmp.eq.s32.totalorder %s13, 0
    %p96 = por %p94, %p95
    %p97 = scmp.ne.s32.totalorder %s89, %s91
    %p98 = scmp.eq.s32.totalorder %s18, 1
    %p99 = por %p97, %p98
    %p100 = scmp.ne.s32.totalorder %s91, %s92
    %p101 = scmp.eq.s32.totalorder %s18, 0
    %p102 = por %p100, %p101
    %p103 = scmp.ne.s32.totalorder %s91, %s92
    %p104 = scmp.eq.s32.totalorder %s19, 1
    %p105 = por %p103, %p104
    %p107 = scmp.ne.s32.totalorder %s92, %s106
    %p108 = scmp.eq.s32.totalorder %s19, 0
    %p109 = por %p107, %p108
    %s111 = sadd.s32 %s110, 1
    %p114 = scmp.eq.s32.totalorder %s13, 1
    %p115 = scmp.ne.s32.totalorder %s110, %s112
    %p116 = scmp.eq.s32.totalorder %s13, 0
    %p117 = por %p115, %p116
    %p118 = scmp.ne.s32.totalorder %s110, %s112
    %p119 = scmp.eq.s32.totalorder %s18, 1
    %p120 = por %p118, %p119
    %p121 = scmp.ne.s32.totalorder %s112, %s113
    %p122 = scmp.eq.s32.totalorder %s18, 0
    %p123 = por %p121, %p122
    %p124 = scmp.ne.s32.totalorder %s112, %s113
    %p125 = scmp.eq.s32.totalorder %s19, 1
    %p126 = por %p124, %p125
    %p128 = scmp.ne.s32.totalorder %s113, %s127
    %p129 = scmp.eq.s32.totalorder %s19, 0
    %p130 = por %p128, %p129
    %s132 = sadd.s32 %s131, 1
    %p135 = scmp.eq.s32.totalorder %s13, 1
    %p136 = scmp.ne.s32.totalorder %s131, %s133
    %p137 = scmp.eq.s32.totalorder %s13, 0
    %p138 = por %p136, %p137
    %p139 = scmp.ne.s32.totalorder %s131, %s133
    %p140 = scmp.eq.s32.totalorder %s18, 1
    %p141 = por %p139, %p140
    %p142 = scmp.ne.s32.totalorder %s133, %s134
    %p143 = scmp.eq.s32.totalorder %s18, 0
    %p144 = por %p142, %p143
    %p145 = scmp.ne.s32.totalorder %s133, %s134
    %p146 = scmp.eq.s32.totalorder %s19, 1
    %p147 = por %p145, %p146
    %p149 = scmp.ne.s32.totalorder %s134, %s148
    %p150 = scmp.eq.s32.totalorder %s19, 0
    %p151 = por %p149, %p150
    %s153 = sadd.s32 %s152, 1
    %p156 = scmp.eq.s32.totalorder %s13, 1
    %p157 = scmp.ne.s32.totalorder %s152, %s154
    %p158 = scmp.eq.s32.totalorder %s13, 0
    %p159 = por %p157, %p158
    %p160 = scmp.ne.s32.totalorder %s152, %s154
    %p161 = scmp.eq.s32.totalorder %s18, 1
    %p162 = por %p160, %p161
    %p163 = scmp.ne.s32.totalorder %s154, %s155
    %p164 = scmp.eq.s32.totalorder %s18, 0
    %p165 = por %p163, %p164
    %p166 = scmp.ne.s32.totalorder %s154, %s155
    %p167 = scmp.eq.s32.totalorder %s19, 1
    %p168 = por %p166, %p167
    %p170 = scmp.ne.s32.totalorder %s155, %s169
    %p171 = scmp.eq.s32.totalorder %s19, 0
    %p172 = por %p170, %p171
    %s173 = ssub.s32 %s13, %s20
    %p174 = scmp.eq.s32.totalorder %s173, 0
    %s176 = sadd.s32 %s175, 1
    %s177 = scalar_select %p174, %s175, %s176
    %p180 = pneg %p174
    %p181 = scmp.eq.s32.totalorder %s13, 1
    %p182 = por %p180, %p181
    %p183 = scmp.ne.s32.totalorder %s175, %s178
    %p184 = scmp.eq.s32.totalorder %s13, 0
    %p185 = por %p183, %p184
    %p186 = scmp.ne.s32.totalorder %s175, %s178
    %p187 = scmp.eq.s32.totalorder %s18, 1
    %p188 = por %p186, %p187
    %p189 = scmp.ne.s32.totalorder %s178, %s179
    %p190 = scmp.eq.s32.totalorder %s18, 0
    %p191 = por %p189, %p190
    %p192 = scmp.ne.s32.totalorder %s178, %s179
    %p193 = scmp.eq.s32.totalorder %s19, 1
    %p194 = por %p192, %p193
    %p196 = scmp.ne.s32.totalorder %s179, %s195
    %p197 = scmp.eq.s32.totalorder %s19, 0
    %p198 = por %p196, %p197
    %p199 = scmp.le.s32.totalorder 1, %s13
    %p200 = scmp.lt.s32.totalorder %s13, 3
    %p201 = pnand %p199, %p200
    %p202 = pneg %p201
    // Predicated region
    $region9: #{tpu_custom_call.1} parent=5 // pred_check
      _
    $region10: #{tpu_custom_call.1} parent=5 // pred_check_branch
      %204 = sbr.rel (%p201) target = $region12
    $region11: #{tpu_custom_call.1} parent=5 // pred_region
      %s205 = ssub.s32 %s13, 1
      // Predicated region
      $region13: #{tpu_custom_call.1} parent=11 // pred_check
        %p206 = pneg %p60
      $region14: #{tpu_custom_call.1} parent=11 // pred_check_branch
        %208 = sbr.rel (%p206) target = $region16
      $region15: #{tpu_custom_call.1} parent=11 // pred_region
        _
      $region16: #{tpu_custom_call.1} parent=11 // pred_fallthru
        _
      // Predicated region
      $region17: #{tpu_custom_call.1} parent=11 // pred_check
        %p209 = pneg %p81
      $region18: #{tpu_custom_call.1} parent=11 // pred_check_branch
        %211 = sbr.rel (%p209) target = $region20
      $region19: #{tpu_custom_call.1} parent=11 // pred_region
        _
      $region20: #{tpu_custom_call.1} parent=11 // pred_fallthru
        _
      // Predicated region
      $region21: #{tpu_custom_call.1} parent=11 // pred_check
        %p212 = pneg %p102
      $region22: #{tpu_custom_call.1} parent=11 // pred_check_branch
        %214 = sbr.rel (%p212) target = $region24
      $region23: #{tpu_custom_call.1} parent=11 // pred_region
        _
      $region24: #{tpu_custom_call.1} parent=11 // pred_fallthru
        _
      // Predicated region
      $region25: #{tpu_custom_call.1} parent=11 // pred_check
        %p215 = pneg %p123
      $region26: #{tpu_custom_call.1} parent=11 // pred_check_branch
        %217 = sbr.rel (%p215) target = $region28
      $region27: #{tpu_custom_call.1} parent=11 // pred_region
        _
      $region28: #{tpu_custom_call.1} parent=11 // pred_fallthru
        _
      // Predicated region
      $region29: #{tpu_custom_call.1} parent=11 // pred_check
        %p218 = pneg %p144
      $region30: #{tpu_custom_call.1} parent=11 // pred_check_branch
        %220 = sbr.rel (%p218) target = $region32
      $region31: #{tpu_custom_call.1} parent=11 // pred_region
        _
      $region32: #{tpu_custom_call.1} parent=11 // pred_fallthru
        _
      // Predicated region
      $region33: #{tpu_custom_call.1} parent=11 // pred_check
        %p221 = pneg %p165
      $region34: #{tpu_custom_call.1} parent=11 // pred_check_branch
        %223 = sbr.rel (%p221) target = $region36
      $region35: #{tpu_custom_call.1} parent=11 // pred_region
        _
      $region36: #{tpu_custom_call.1} parent=11 // pred_fallthru
        _
    $region12: #{tpu_custom_call.1} parent=5 // pred_fallthru
      _
    %p224 = scmp.lt.s32.totalorder %s13, 2
    // Predicated region
    $region37: #{tpu_custom_call.1} parent=5 // pred_check
      %p225 = pneg %p224
    $region38: #{tpu_custom_call.1} parent=5 // pred_check_branch
      %227 = sbr.rel (%p225) target = $region40
    $region39: #{tpu_custom_call.1} parent=5 // pred_region
      // Predicated region
      $region41: #{tpu_custom_call.1} parent=39 // pred_check
        %p228 = pneg %p33
      $region42: #{tpu_custom_call.1} parent=39 // pred_check_branch
        %230 = sbr.rel (%p228) target = $region44
      $region43: #{tpu_custom_call.1} parent=39 // pred_region
        %s231 = smul.u32 16, %s13
        %p232 = scmp.lt.s32.totalorder %s231, 31
        %s233 = scalar_select %p232, %s231, 31
        %s234 = smul.addr %s233, 8
        %s235 = scalar_lea.vmem %s0, %s234
        %s236 = smul.u32 16, %s13
      $region44: #{tpu_custom_call.1} parent=39 // pred_fallthru
        _
    $region40: #{tpu_custom_call.1} parent=5 // pred_fallthru
      _
    %p237 = scmp.le.s32.totalorder 1, %s13
    %p238 = scmp.lt.s32.totalorder %s13, 3
    %p239 = pnand %p237, %p238
    %p240 = pneg %p239
    // Predicated region
    $region45: #{tpu_custom_call.1} parent=5 // pred_check
      _
    $region46: #{tpu_custom_call.1} parent=5 // pred_check_branch
      %242 = sbr.rel (%p239) target = $region48
    $region47: #{tpu_custom_call.1} parent=5 // pred_region
      %s243 = ssub.s32 %s13, 1
      %s244 = smul.u32 16, %s18
      %p245 = scmp.lt.s32.totalorder %s244, 31
      %s246 = scalar_select %p245, %s244, 31
      %s247 = smul.addr %s246, 8
      %s248 = scalar_lea.vmem %s0, %s247
      %p249 = pneg %p39
      %p250 = pneg %p36
      %p251 = pneg %p60
      %p252 = pneg %p57
      %p253 = pneg %p81
      %p254 = pneg %p78
      %p255 = pneg %p102
      %p256 = pneg %p99
      %p257 = pneg %p123
      %p258 = pneg %p120
      %p259 = pneg %p144
      %p260 = pneg %p141
      %p261 = pneg %p165
      %p262 = pneg %p162
      %p263 = pneg %p191
      %p264 = pneg %p188
      %s265 = smul.u32 16, %s18
      %p266 = scmp.lt.s32.totalorder %s265, 31
      %s267 = scalar_select %p266, %s265, 31
      %s268 = smul.addr %s267, 8
      %s269 = scalar_lea.vmem %s7, %s268
      %s270 = smul.u32 16, %s18
      %p271 = scmp.lt.s32.totalorder %s270, 31
      %s272 = scalar_select %p271, %s270, 31
      %s273 = smul.addr %s272, 8
      %s274 = scalar_lea.vmem %s0, %s273
      %s275 = smul.u32 16, %s18
      %s276 = smul.u32 16, %s18
      %p277 = scmp.lt.s32.totalorder %s276, 31
      %s278 = scalar_select %p277, %s276, 31
      %s279 = smul.addr %s278, 8
      %s280 = scalar_lea.vmem %s7, %s279
      %s281 = smul.u32 16, %s18
      %v283 = vld [vmem:[%s274] sm:$0xff]
      %v284 = vld [vmem:[%s274 + $0x8] sm:$0xff]
      %v285 = vld [vmem:[%s274 + $0x10] sm:$0xff]
      %v286 = vld [vmem:[%s274 + $0x18] sm:$0xff]
      %v287 = vld [vmem:[%s274 + $0x20] sm:$0xff]
      %v288 = vld [vmem:[%s274 + $0x28] sm:$0xff]
      %v289 = vld [vmem:[%s274 + $0x30] sm:$0xff]
      %v290 = vld [vmem:[%s274 + $0x38] sm:$0xff]
      %v291 = vld [vmem:[%s274 + $0x40] sm:$0xff]
      %v292 = vld [vmem:[%s274 + $0x48] sm:$0xff]
      %v293 = vld [vmem:[%s274 + $0x50] sm:$0xff]
      %v294 = vld [vmem:[%s274 + $0x58] sm:$0xff]
      %v295 = vld [vmem:[%s274 + $0x60] sm:$0xff]
      %v296 = vld [vmem:[%s274 + $0x68] sm:$0xff]
      %v297 = vld [vmem:[%s274 + $0x70] sm:$0xff]
      %v298 = vld [vmem:[%s274 + $0x78] sm:$0xff]
      %v299 = vpack.c.bf16 %v284, %v283
      %v300 = vpack.c.bf16 %v286, %v285
      %v301 = vpack.c.bf16 %v288, %v287
      %v302 = vpack.c.bf16 %v290, %v289
      %v303 = vpack.c.bf16 %v292, %v291
      %v304 = vpack.c.bf16 %v294, %v293
      %v305 = vpack.c.bf16 %v296, %v295
      %v306 = vpack.c.bf16 %v298, %v297
      %v307 = vld [vmem:[%s1] sm:$0xf]
      %v308 = vld [vmem:[%s1 + $0x4] sm:$0xf]
      %v309 = vld [vmem:[%s1 + $0x8] sm:$0xf]
      %v310 = vld [vmem:[%s1 + $0xc] sm:$0xf]
      %v311 = vld [vmem:[%s2] sm:$0x1]
      %v313 = vlaneseq
      %v314 = vshrl.u32 %v313, 7
      %v315 = vsub.s32 0, %v314
      %v316 = vrot.slane %v311, %v315
      %v322 = vunpack.c.l.b16 %v307
      %v323 = vunpack.c.l.b16 %v308
      %v324 = vunpack.c.l.b16 %v309
      %v325 = vunpack.c.l.b16 %v310
      %v326 = vpack.c.b16 %v323, %v322
      %v327 = vpack.c.b16 %v325, %v324
      %vm330 = vcmask 261120
      %v332 = vsel %vm330, %v299, 0
      %v335 = vsel %vm330, %v300, 0
      %v338 = vsel %vm330, %v301, 0
      %v341 = vsel %vm330, %v302, 0
      %v344 = vsel %vm330, %v303, 0
      %v347 = vsel %vm330, %v304, 0
      %v350 = vsel %vm330, %v305, 0
      %v353 = vsel %vm330, %v306, 0
      %355 = vmatprep.subr.bf16.mxu0 0
      %356 = vmatpush1.bf16.msra.mxu0 %v326
      %357 = vmatprep.subr.bf16.mxu0 0
      %358 = vmatpush1.bf16.msra.mxu0 %v327
      %359 = vmatprep.subr.bf16.mxu0 0
      %360 = vmatpush1.bf16.msra.mxu0 0
      %361 = vmatprep.subr.bf16.mxu0 0
      %362 = vmatpush1.bf16.msra.mxu0 0
      %363 = vmatprep.subr.bf16.mxu0 0
      %364 = vmatpush1.bf16.msra.mxu0 0
      %365 = vmatprep.subr.bf16.mxu0 0
      %366 = vmatpush1.bf16.msra.mxu0 0
      %367 = vmatprep.subr.bf16.mxu0 0
      %368 = vmatpush1.bf16.msra.mxu0 0
      %369 = vmatprep.subr.bf16.mxu0 0
      %370 = vmatpush1.bf16.msra.mxu0 0
      %371 = vmatprep.subr.bf16.mxu0 0
      %372 = vmatpush1.bf16.msra.mxu0 0
      %373 = vmatprep.subr.bf16.mxu0 0
      %374 = vmatpush1.bf16.msra.mxu0 0
      %375 = vmatprep.subr.bf16.mxu0 0
      %376 = vmatpush1.bf16.msra.mxu0 0
      %377 = vmatprep.subr.bf16.mxu0 0
      %378 = vmatpush1.bf16.msra.mxu0 0
      %379 = vmatprep.subr.bf16.mxu0 0
      %380 = vmatpush1.bf16.msra.mxu0 0
      %381 = vmatprep.subr.bf16.mxu0 0
      %382 = vmatpush1.bf16.msra.mxu0 0
      %383 = vmatprep.subr.bf16.mxu0 0
      %384 = vmatpush1.bf16.msra.mxu0 0
      %385 = vmatprep.subr.bf16.mxu0 0
      %386 = vmatpush1.bf16.msra.mxu0 0
      %387 = vmatprep.mubr.bf16.mxu0 0
      %388 = vmatmul.mubr.bf16.gmra.mrb[0].mxu0 %v332
      %v389 = vpop.f32.mrb[0].mxu0
      %v390 = vadd.f32 %v316, %v389
      %v391 = vpop.f32.mrb[0].mxu0
      %v392 = vpop.f32.mrb[0].mxu0
      %v393 = vadd.f32 %v316, %v392
      %v394 = vpop.f32.mrb[0].mxu0
      %395 = vmatprep.mubr.bf16.mxu0 0
      %396 = vmatmul.mubr.bf16.gmra.mrb[0].mxu0 %v335
      %v397 = vpop.f32.mrb[0].mxu0
      %v398 = vadd.f32 %v316, %v397
      %v399 = vpop.f32.mrb[0].mxu0
      %v400 = vpop.f32.mrb[0].mxu0
      %v401 = vadd.f32 %v316, %v400
      %v402 = vpop.f32.mrb[0].mxu0
      %403 = vmatprep.mubr.bf16.mxu0 0
      %404 = vmatmul.mubr.bf16.gmra.mrb[0].mxu0 %v338
      %v405 = vpop.f32.mrb[0].mxu0
      %v406 = vadd.f32 %v316, %v405
      %v407 = vpop.f32.mrb[0].mxu0
      %v408 = vpop.f32.mrb[0].mxu0
      %v409 = vadd.f32 %v316, %v408
      %v410 = vpop.f32.mrb[0].mxu0
      %411 = vmatprep.mubr.bf16.mxu0 0
      %412 = vmatmul.mubr.bf16.gmra.mrb[0].mxu0 %v341
      %v413 = vpop.f32.mrb[0].mxu0
      %v414 = vadd.f32 %v316, %v413
      %v415 = vpop.f32.mrb[0].mxu0
      %v416 = vpop.f32.mrb[0].mxu0
      %v417 = vadd.f32 %v316, %v416
      %v418 = vpop.f32.mrb[0].mxu0
      %419 = vmatprep.mubr.bf16.mxu0 0
      %420 = vmatmul.mubr.bf16.gmra.mrb[0].mxu0 %v344
      %v421 = vpop.f32.mrb[0].mxu0
      %v422 = vadd.f32 %v316, %v421
      %v423 = vpop.f32.mrb[0].mxu0
      %v424 = vpop.f32.mrb[0].mxu0
      %v425 = vadd.f32 %v316, %v424
      %v426 = vpop.f32.mrb[0].mxu0
      %427 = vmatprep.mubr.bf16.mxu0 0
      %428 = vmatmul.mubr.bf16.gmra.mrb[0].mxu0 %v347
      %v429 = vpop.f32.mrb[0].mxu0
      %v430 = vadd.f32 %v316, %v429
      %v431 = vpop.f32.mrb[0].mxu0
      %v432 = vpop.f32.mrb[0].mxu0
      %v433 = vadd.f32 %v316, %v432
      %v434 = vpop.f32.mrb[0].mxu0
      %435 = vmatprep.mubr.bf16.mxu0 0
      %436 = vmatmul.mubr.bf16.gmra.mrb[0].mxu0 %v350
      %v437 = vpop.f32.mrb[0].mxu0
      %v438 = vadd.f32 %v316, %v437
      %v439 = vpop.f32.mrb[0].mxu0
      %v440 = vpop.f32.mrb[0].mxu0
      %v441 = vadd.f32 %v316, %v440
      %v442 = vpop.f32.mrb[0].mxu0
      %443 = vmatprep.mubr.bf16.mxu0 0
      %444 = vmatmul.mubr.bf16.gmra.mrb[0].mxu0 %v353
      %v445 = vpop.f32.mrb[0].mxu0
      %v446 = vadd.f32 %v316, %v445
      %v447 = vpop.f32.mrb[0].mxu0
      %v448 = vpop.f32.mrb[0].mxu0
      %v449 = vadd.f32 %v316, %v448
      %v450 = vpop.f32.mrb[0].mxu0
      %451 = vdwg.mxu0
      %v452 = vmax.f32 %v390, 0.0
      %v453 = vmax.f32 %v393, 0.0
      %v454 = vmax.f32 %v398, 0.0
      %v455 = vmax.f32 %v401, 0.0
      %v456 = vmax.f32 %v406, 0.0
      %v457 = vmax.f32 %v409, 0.0
      %v458 = vmax.f32 %v414, 0.0
      %v459 = vmax.f32 %v417, 0.0
      %v460 = vmax.f32 %v422, 0.0
      %v461 = vmax.f32 %v425, 0.0
      %v462 = vmax.f32 %v430, 0.0
      %v463 = vmax.f32 %v433, 0.0
      %v464 = vmax.f32 %v438, 0.0
      %v465 = vmax.f32 %v441, 0.0
      %v466 = vmax.f32 %v446, 0.0
      %v467 = vmax.f32 %v449, 0.0
      %v468 = vpack.c.bf16 %v453, %v452
      %v469 = vpack.c.bf16 %v455, %v454
      %v470 = vpack.c.bf16 %v457, %v456
      %v471 = vpack.c.bf16 %v459, %v458
      %v472 = vpack.c.bf16 %v461, %v460
      %v473 = vpack.c.bf16 %v463, %v462
      %v474 = vpack.c.bf16 %v465, %v464
      %v475 = vpack.c.bf16 %v467, %v466
      %v476 = vld [vmem:[%s3] sm:$0xf]
      %v477 = vld [vmem:[%s3 + $0x4] sm:$0xf]
      %v478 = vld [vmem:[%s3 + $0x8] sm:$0xf]
      %v479 = vld [vmem:[%s3 + $0xc] sm:$0xf]
      %v480 = vld [vmem:[%s3 + $0x10] sm:$0xf]
      %v481 = vld [vmem:[%s3 + $0x14] sm:$0xf]
      %v482 = vld [vmem:[%s3 + $0x18] sm:$0xf]
      %v483 = vld [vmem:[%s3 + $0x1c] sm:$0xf]
      %v484 = vld [vmem:[%s4] sm:$0x1]
      %v486 = vlaneseq
      %v487 = vshrl.u32 %v486, 7
      %v488 = vsub.s32 0, %v487
      %v489 = vrot.slane %v484, %v488
      %v499 = vunpack.c.l.b16 %v476
      %v500 = vunpack.c.l.b16 %v477
      %v501 = vunpack.c.l.b16 %v478
      %v502 = vunpack.c.l.b16 %v479
      %v503 = vunpack.c.l.b16 %v480
      %v504 = vunpack.c.l.b16 %v481
      %v505 = vunpack.c.l.b16 %v482
      %v506 = vunpack.c.l.b16 %v483
      %v507 = vpack.c.b16 %v500, %v499
      %v508 = vpack.c.b16 %v502, %v501
      %v509 = vpack.c.b16 %v504, %v503
      %v510 = vpack.c.b16 %v506, %v505
      %vm515 = vcmask 523264
      %v517 = vsel %vm515, %v468, 0
      %v520 = vsel %vm515, %v469, 0
      %v523 = vsel %vm515, %v470, 0
      %v526 = vsel %vm515, %v471, 0
      %v529 = vsel %vm515, %v472, 0
      %v532 = vsel %vm515, %v473, 0
      %v535 = vsel %vm515, %v474, 0
      %v538 = vsel %vm515, %v475, 0
      %540 = vmatprep.subr.bf16.mxu0 0
      %541 = vmatpush1.bf16.msra.mxu0 %v507
      %542 = vmatprep.subr.bf16.mxu0 0
      %543 = vmatpush1.bf16.msra.mxu0 %v508
      %544 = vmatprep.subr.bf16.mxu0 0
      %545 = vmatpush1.bf16.msra.mxu0 %v509
      %546 = vmatprep.subr.bf16.mxu0 0
      %547 = vmatpush1.bf16.msra.mxu0 %v510
      %548 = vmatprep.subr.bf16.mxu0 0
      %549 = vmatpush1.bf16.msra.mxu0 0
      %550 = vmatprep.subr.bf16.mxu0 0
      %551 = vmatpush1.bf16.msra.mxu0 0
      %552 = vmatprep.subr.bf16.mxu0 0
      %553 = vmatpush1.bf16.msra.mxu0 0
      %554 = vmatprep.subr.bf16.mxu0 0
      %555 = vmatpush1.bf16.msra.mxu0 0
      %556 = vmatprep.subr.bf16.mxu0 0
      %557 = vmatpush1.bf16.msra.mxu0 0
      %558 = vmatprep.subr.bf16.mxu0 0
      %559 = vmatpush1.bf16.msra.mxu0 0
      %560 = vmatprep.subr.bf16.mxu0 0
      %561 = vmatpush1.bf16.msra.mxu0 0
      %562 = vmatprep.subr.bf16.mxu0 0
      %563 = vmatpush1.bf16.msra.mxu0 0
      %564 = vmatprep.subr.bf16.mxu0 0
      %565 = vmatpush1.bf16.msra.mxu0 0
      %566 = vmatprep.subr.bf16.mxu0 0
      %567 = vmatpush1.bf16.msra.mxu0 0
      %568 = vmatprep.subr.bf16.mxu0 0
      %569 = vmatpush1.bf16.msra.mxu0 0
      %570 = vmatprep.subr.bf16.mxu0 0
      %571 = vmatpush1.bf16.msra.mxu0 0
      %572 = vmatprep.mubr.bf16.mxu0 0
      %573 = vmatmul.mubr.bf16.gmra.mrb[0].mxu0 %v517
      %v574 = vpop.f32.mrb[0].mxu0
      %v575 = vadd.f32 %v489, %v574
      %v576 = vpop.f32.mrb[0].mxu0
      %v577 = vpop.f32.mrb[0].mxu0
      %v578 = vadd.f32 %v489, %v577
      %v579 = vpop.f32.mrb[0].mxu0
      %580 = vmatprep.mubr.bf16.mxu0 0
      %581 = vmatmul.mubr.bf16.gmra.mrb[0].mxu0 %v520
      %v582 = vpop.f32.mrb[0].mxu0
      %v583 = vadd.f32 %v489, %v582
      %v584 = vpop.f32.mrb[0].mxu0
      %v585 = vpop.f32.mrb[0].mxu0
      %v586 = vadd.f32 %v489, %v585
      %v587 = vpop.f32.mrb[0].mxu0
      %588 = vmatprep.mubr.bf16.mxu0 0
      %589 = vmatmul.mubr.bf16.gmra.mrb[0].mxu0 %v523
      %v590 = vpop.f32.mrb[0].mxu0
      %v591 = vadd.f32 %v489, %v590
      %v592 = vpop.f32.mrb[0].mxu0
      %v593 = vpop.f32.mrb[0].mxu0
      %v594 = vadd.f32 %v489, %v593
      %v595 = vpop.f32.mrb[0].mxu0
      %596 = vmatprep.mubr.bf16.mxu0 0
      %597 = vmatmul.mubr.bf16.gmra.mrb[0].mxu0 %v526
      %v598 = vpop.f32.mrb[0].mxu0
      %v599 = vadd.f32 %v489, %v598
      %v600 = vpop.f32.mrb[0].mxu0
      %v601 = vpop.f32.mrb[0].mxu0
      %v602 = vadd.f32 %v489, %v601
      %v603 = vpop.f32.mrb[0].mxu0
      %604 = vmatprep.mubr.bf16.mxu0 0
      %605 = vmatmul.mubr.bf16.gmra.mrb[0].mxu0 %v529
      %v606 = vpop.f32.mrb[0].mxu0
      %v607 = vadd.f32 %v489, %v606
      %v608 = vpop.f32.mrb[0].mxu0
      %v609 = vpop.f32.mrb[0].mxu0
      %v610 = vadd.f32 %v489, %v609
      %v611 = vpop.f32.mrb[0].mxu0
      %612 = vmatprep.mubr.bf16.mxu0 0
      %613 = vmatmul.mubr.bf16.gmra.mrb[0].mxu0 %v532
      %v614 = vpop.f32.mrb[0].mxu0
      %v615 = vadd.f32 %v489, %v614
      %v616 = vpop.f32.mrb[0].mxu0
      %v617 = vpop.f32.mrb[0].mxu0
      %v618 = vadd.f32 %v489, %v617
      %v619 = vpop.f32.mrb[0].mxu0
      %620 = vmatprep.mubr.bf16.mxu0 0
      %621 = vmatmul.mubr.bf16.gmra.mrb[0].mxu0 %v535
      %v622 = vpop.f32.mrb[0].mxu0
      %v623 = vadd.f32 %v489, %v622
      %v624 = vpop.f32.mrb[0].mxu0
      %v625 = vpop.f32.mrb[0].mxu0
      %v626 = vadd.f32 %v489, %v625
      %v627 = vpop.f32.mrb[0].mxu0
      %628 = vmatprep.mubr.bf16.mxu0 0
      %629 = vmatmul.mubr.bf16.gmra.mrb[0].mxu0 %v538
      %v630 = vpop.f32.mrb[0].mxu0
      %v631 = vadd.f32 %v489, %v630
      %v632 = vpop.f32.mrb[0].mxu0
      %v633 = vpop.f32.mrb[0].mxu0
      %v634 = vadd.f32 %v489, %v633
      %v635 = vpop.f32.mrb[0].mxu0
      %636 = vdwg.mxu0
      %v637 = vmax.f32 %v575, 0.0
      %v638 = vmax.f32 %v578, 0.0
      %v639 = vmax.f32 %v583, 0.0
      %v640 = vmax.f32 %v586, 0.0
      %v641 = vmax.f32 %v591, 0.0
      %v642 = vmax.f32 %v594, 0.0
      %v643 = vmax.f32 %v599, 0.0
      %v644 = vmax.f32 %v602, 0.0
      %v645 = vmax.f32 %v607, 0.0
      %v646 = vmax.f32 %v610, 0.0
      %v647 = vmax.f32 %v615, 0.0
      %v648 = vmax.f32 %v618, 0.0
      %v649 = vmax.f32 %v623, 0.0
      %v650 = vmax.f32 %v626, 0.0
      %v651 = vmax.f32 %v631, 0.0
      %v652 = vmax.f32 %v634, 0.0
      %v653 = vpack.c.bf16 %v638, %v637
      %v654 = vpack.c.bf16 %v640, %v639
      %v655 = vpack.c.bf16 %v642, %v641
      %v656 = vpack.c.bf16 %v644, %v643
      %v657 = vpack.c.bf16 %v646, %v645
      %v658 = vpack.c.bf16 %v648, %v647
      %v659 = vpack.c.bf16 %v650, %v649
      %v660 = vpack.c.bf16 %v652, %v651
      %v661 = vld [vmem:[%s5] sm:$0xf]
      %v662 = vld [vmem:[%s5 + $0x4] sm:$0xf]
      %v663 = vld [vmem:[%s5 + $0x8] sm:$0xf]
      %v664 = vld [vmem:[%s5 + $0xc] sm:$0xf]
      %v665 = vld [vmem:[%s6] sm:$0x1]
      %v667 = vlaneseq
      %v668 = vshrl.u32 %v667, 7
      %v669 = vsub.s32 0, %v668
      %v670 = vrot.slane %v665, %v669
      %v676 = vunpack.c.l.b16 %v661
      %v677 = vunpack.c.l.b16 %v662
      %v678 = vunpack.c.l.b16 %v663
      %v679 = vunpack.c.l.b16 %v664
      %v680 = vpack.c.b16 %v677, %v676
      %v681 = vpack.c.b16 %v679, %v678
      %v685 = vsel %vm330, %v653, 0
      %v688 = vsel %vm330, %v654, 0
      %v691 = vsel %vm330, %v655, 0
      %v694 = vsel %vm330, %v656, 0
      %v697 = vsel %vm330, %v657, 0
      %v700 = vsel %vm330, %v658, 0
      %v703 = vsel %vm330, %v659, 0
      %v706 = vsel %vm330, %v660, 0
      %708 = vmatprep.subr.bf16.mxu0 0
      %709 = vmatpush1.bf16.msra.mxu0 %v680
      %710 = vmatprep.subr.bf16.mxu0 0
      %711 = vmatpush1.bf16.msra.mxu0 %v681
      %712 = vmatprep.subr.bf16.mxu0 0
      %713 = vmatpush1.bf16.msra.mxu0 0
      %714 = vmatprep.subr.bf16.mxu0 0
      %715 = vmatpush1.bf16.msra.mxu0 0
      %716 = vmatprep.subr.bf16.mxu0 0
      %717 = vmatpush1.bf16.msra.mxu0 0
      %718 = vmatprep.subr.bf16.mxu0 0
      %719 = vmatpush1.bf16.msra.mxu0 0
      %720 = vmatprep.subr.bf16.mxu0 0
      %721 = vmatpush1.bf16.msra.mxu0 0
      %722 = vmatprep.subr.bf16.mxu0 0
      %723 = vmatpush1.bf16.msra.mxu0 0
      %724 = vmatprep.subr.bf16.mxu0 0
      %725 = vmatpush1.bf16.msra.mxu0 0
      %726 = vmatprep.subr.bf16.mxu0 0
      %727 = vmatpush1.bf16.msra.mxu0 0
      %728 = vmatprep.subr.bf16.mxu0 0
      %729 = vmatpush1.bf16.msra.mxu0 0
      %730 = vmatprep.subr.bf16.mxu0 0
      %731 = vmatpush1.bf16.msra.mxu0 0
      %732 = vmatprep.subr.bf16.mxu0 0
      %733 = vmatpush1.bf16.msra.mxu0 0
      %734 = vmatprep.subr.bf16.mxu0 0
      %735 = vmatpush1.bf16.msra.mxu0 0
      %736 = vmatprep.subr.bf16.mxu0 0
      %737 = vmatpush1.bf16.msra.mxu0 0
      %738 = vmatprep.subr.bf16.mxu0 0
      %739 = vmatpush1.bf16.msra.mxu0 0
      %740 = vmatprep.mubr.bf16.mxu0 0
      %741 = vmatmul.mubr.bf16.gmra.mrb[0].mxu0 %v685
      %v742 = vpop.f32.mrb[0].mxu0
      %v743 = vadd.f32 %v670, %v742
      %v744 = vpop.f32.mrb[0].mxu0
      %v745 = vpop.f32.mrb[0].mxu0
      %v746 = vadd.f32 %v670, %v745
      %v747 = vpop.f32.mrb[0].mxu0
      %748 = vmatprep.mubr.bf16.mxu0 0
      %749 = vmatmul.mubr.bf16.gmra.mrb[0].mxu0 %v688
      %v750 = vpop.f32.mrb[0].mxu0
      %v751 = vadd.f32 %v670, %v750
      %v752 = vpop.f32.mrb[0].mxu0
      %v753 = vpop.f32.mrb[0].mxu0
      %v754 = vadd.f32 %v670, %v753
      %v755 = vpop.f32.mrb[0].mxu0
      %756 = vmatprep.mubr.bf16.mxu0 0
      %757 = vmatmul.mubr.bf16.gmra.mrb[0].mxu0 %v691
      %v758 = vpop.f32.mrb[0].mxu0
      %v759 = vadd.f32 %v670, %v758
      %v760 = vpop.f32.mrb[0].mxu0
      %v761 = vpop.f32.mrb[0].mxu0
      %v762 = vadd.f32 %v670, %v761
      %v763 = vpop.f32.mrb[0].mxu0
      %764 = vmatprep.mubr.bf16.mxu0 0
      %765 = vmatmul.mubr.bf16.gmra.mrb[0].mxu0 %v694
      %v766 = vpop.f32.mrb[0].mxu0
      %v767 = vadd.f32 %v670, %v766
      %v768 = vpop.f32.mrb[0].mxu0
      %v769 = vpop.f32.mrb[0].mxu0
      %v770 = vadd.f32 %v670, %v769
      %v771 = vpop.f32.mrb[0].mxu0
      %772 = vmatprep.mubr.bf16.mxu0 0
      %773 = vmatmul.mubr.bf16.gmra.mrb[0].mxu0 %v697
      %v774 = vpop.f32.mrb[0].mxu0
      %v775 = vadd.f32 %v670, %v774
      %v776 = vpop.f32.mrb[0].mxu0
      %v777 = vpop.f32.mrb[0].mxu0
      %v778 = vadd.f32 %v670, %v777
      %v779 = vpop.f32.mrb[0].mxu0
      %780 = vmatprep.mubr.bf16.mxu0 0
      %781 = vmatmul.mubr.bf16.gmra.mrb[0].mxu0 %v700
      %v782 = vpop.f32.mrb[0].mxu0
      %v783 = vadd.f32 %v670, %v782
      %v784 = vpop.f32.mrb[0].mxu0
      %v785 = vpop.f32.mrb[0].mxu0
      %v786 = vadd.f32 %v670, %v785
      %v787 = vpop.f32.mrb[0].mxu0
      %788 = vmatprep.mubr.bf16.mxu0 0
      %789 = vmatmul.mubr.bf16.gmra.mrb[0].mxu0 %v703
      %v790 = vpop.f32.mrb[0].mxu0
      %v791 = vadd.f32 %v670, %v790
      %v792 = vpop.f32.mrb[0].mxu0
      %v793 = vpop.f32.mrb[0].mxu0
      %v794 = vadd.f32 %v670, %v793
      %v795 = vpop.f32.mrb[0].mxu0
      %796 = vmatprep.mubr.bf16.mxu0 0
      %797 = vmatmul.mubr.bf16.gmra.mrb[0].mxu0 %v706
      %v798 = vpop.f32.mrb[0].mxu0
      %v799 = vadd.f32 %v670, %v798
      %v800 = vpop.f32.mrb[0].mxu0
      %v801 = vpop.f32.mrb[0].mxu0
      %v802 = vadd.f32 %v670, %v801
      %v803 = vpop.f32.mrb[0].mxu0
      %804 = vdwg.mxu0
      %v805 = vxor.u32 %v743, 2147483648
      %v806 = vxor.u32 %v746, 2147483648
      %v807 = vxor.u32 %v751, 2147483648
      %v808 = vxor.u32 %v754, 2147483648
      %v809 = vxor.u32 %v759, 2147483648
      %v810 = vxor.u32 %v762, 2147483648
      %v811 = vxor.u32 %v767, 2147483648
      %v812 = vxor.u32 %v770, 2147483648
      %v813 = vxor.u32 %v775, 2147483648
      %v814 = vxor.u32 %v778, 2147483648
      %v815 = vxor.u32 %v783, 2147483648
      %v816 = vxor.u32 %v786, 2147483648
      %v817 = vxor.u32 %v791, 2147483648
      %v818 = vxor.u32 %v794, 2147483648
      %v819 = vxor.u32 %v799, 2147483648
      %v820 = vxor.u32 %v802, 2147483648
      %v821 = vmul.f32 %v805, 1.442695
      %v822 = vpow.pop %v821
      %v823 = vmul.f32 %v806, 1.442695
      %v824 = vpow.pop %v823
      %v825 = vmul.f32 %v807, 1.442695
      %v826 = vpow.pop %v825
      %v827 = vmul.f32 %v808, 1.442695
      %v828 = vpow.pop %v827
      %v829 = vmul.f32 %v809, 1.442695
      %v830 = vpow.pop %v829
      %v831 = vmul.f32 %v810, 1.442695
      %v832 = vpow.pop %v831
      %v833 = vmul.f32 %v811, 1.442695
      %v834 = vpow.pop %v833
      %v835 = vmul.f32 %v812, 1.442695
      %v836 = vpow.pop %v835
      %v837 = vmul.f32 %v813, 1.442695
      %v838 = vpow.pop %v837
      %v839 = vmul.f32 %v814, 1.442695
      %v840 = vpow.pop %v839
      %v841 = vmul.f32 %v815, 1.442695
      %v842 = vpow.pop %v841
      %v843 = vmul.f32 %v816, 1.442695
      %v844 = vpow.pop %v843
      %v845 = vmul.f32 %v817, 1.442695
      %v846 = vpow.pop %v845
      %v847 = vmul.f32 %v818, 1.442695
      %v848 = vpow.pop %v847
      %v849 = vmul.f32 %v819, 1.442695
      %v850 = vpow.pop %v849
      %v851 = vmul.f32 %v820, 1.442695
      %v852 = vpow.pop %v851
      %v853 = vadd.f32 %v822, 1.0
      %v854 = vadd.f32 %v824, 1.0
      %v855 = vadd.f32 %v826, 1.0
      %v856 = vadd.f32 %v828, 1.0
      %v857 = vadd.f32 %v830, 1.0
      %v858 = vadd.f32 %v832, 1.0
      %v859 = vadd.f32 %v834, 1.0
      %v860 = vadd.f32 %v836, 1.0
      %v861 = vadd.f32 %v838, 1.0
      %v862 = vadd.f32 %v840, 1.0
      %v863 = vadd.f32 %v842, 1.0
      %v864 = vadd.f32 %v844, 1.0
      %v865 = vadd.f32 %v846, 1.0
      %v866 = vadd.f32 %v848, 1.0
      %v867 = vadd.f32 %v850, 1.0
      %v868 = vadd.f32 %v852, 1.0
      %v869 = vrcp.pop %v853
      %v870 = vmul.f32 1.0, %v869
      %v871 = vrcp.pop %v854
      %v872 = vmul.f32 1.0, %v871
      %v873 = vrcp.pop %v855
      %v874 = vmul.f32 1.0, %v873
      %v875 = vrcp.pop %v856
      %v876 = vmul.f32 1.0, %v875
      %v877 = vrcp.pop %v857
      %v878 = vmul.f32 1.0, %v877
      %v879 = vrcp.pop %v858
      %v880 = vmul.f32 1.0, %v879
      %v881 = vrcp.pop %v859
      %v882 = vmul.f32 1.0, %v881
      %v883 = vrcp.pop %v860
      %v884 = vmul.f32 1.0, %v883
      %v885 = vrcp.pop %v861
      %v886 = vmul.f32 1.0, %v885
      %v887 = vrcp.pop %v862
      %v888 = vmul.f32 1.0, %v887
      %v889 = vrcp.pop %v863
      %v890 = vmul.f32 1.0, %v889
      %v891 = vrcp.pop %v864
      %v892 = vmul.f32 1.0, %v891
      %v893 = vrcp.pop %v865
      %v894 = vmul.f32 1.0, %v893
      %v895 = vrcp.pop %v866
      %v896 = vmul.f32 1.0, %v895
      %v897 = vrcp.pop %v867
      %v898 = vmul.f32 1.0, %v897
      %v899 = vrcp.pop %v868
      %v900 = vmul.f32 1.0, %v899
      %vm901 = vcmask 64512
      %902 = vst.msk [vmem:[%s280] sm:$0xff] %vm901, %v870
      %903 = vst.msk [vmem:[%s280 + $0x8] sm:$0xff] %vm901, %v872
      %904 = vst.msk [vmem:[%s280 + $0x10] sm:$0xff] %vm901, %v874
      %905 = vst.msk [vmem:[%s280 + $0x18] sm:$0xff] %vm901, %v876
      %906 = vst.msk [vmem:[%s280 + $0x20] sm:$0xff] %vm901, %v878
      %907 = vst.msk [vmem:[%s280 + $0x28] sm:$0xff] %vm901, %v880
      %908 = vst.msk [vmem:[%s280 + $0x30] sm:$0xff] %vm901, %v882
      %909 = vst.msk [vmem:[%s280 + $0x38] sm:$0xff] %vm901, %v884
      %910 = vst.msk [vmem:[%s280 + $0x40] sm:$0xff] %vm901, %v886
      %911 = vst.msk [vmem:[%s280 + $0x48] sm:$0xff] %vm901, %v888
      %912 = vst.msk [vmem:[%s280 + $0x50] sm:$0xff] %vm901, %v890
      %913 = vst.msk [vmem:[%s280 + $0x58] sm:$0xff] %vm901, %v892
      %914 = vst.msk [vmem:[%s280 + $0x60] sm:$0xff] %vm901, %v894
      %915 = vst.msk [vmem:[%s280 + $0x68] sm:$0xff] %vm901, %v896
      %916 = vst.msk [vmem:[%s280 + $0x70] sm:$0xff] %vm901, %v898
      %917 = vst.msk [vmem:[%s280 + $0x78] sm:$0xff] %vm901, %v900
      %s918 = smul.u32 16, %s18
      %p919 = scmp.lt.s32.totalorder %s918, 31
      %s920 = scalar_select %p919, %s918, 31
      %s921 = smul.addr %s920, 8
      %s922 = scalar_lea.vmem %s7, %s921
      // Predicated region
      $region49: #{tpu_custom_call.1} parent=47 // pred_check
        %p923 = pneg %p188
      $region50: #{tpu_custom_call.1} parent=47 // pred_check_branch
        %925 = sbr.rel (%p923) target = $region52
      $region51: #{tpu_custom_call.1} parent=47 // pred_region
        %s926 = smul.u32 16, %s18
      $region52: #{tpu_custom_call.1} parent=47 // pred_fallthru
        _
    $region48: #{tpu_custom_call.1} parent=5 // pred_fallthru
      _
    %p927 = scmp.le.s32.totalorder 2, %s13
    // Predicated region
    $region53: #{tpu_custom_call.1} parent=5 // pred_check
      %p928 = pneg %p927
    $region54: #{tpu_custom_call.1} parent=5 // pred_check_branch
      %930 = sbr.rel (%p928) target = $region56
    $region55: #{tpu_custom_call.1} parent=5 // pred_region
      %s931 = ssub.s32 %s13, 2
      // Predicated region
      $region57: #{tpu_custom_call.1} parent=55 // pred_check
        %p932 = pneg %p194
      $region58: #{tpu_custom_call.1} parent=55 // pred_check_branch
        %934 = sbr.rel (%p932) target = $region60
      $region59: #{tpu_custom_call.1} parent=55 // pred_region
        %s935 = smul.u32 16, %s19
        %p936 = scmp.lt.s32.totalorder %s935, 31
        %s937 = scalar_select %p936, %s935, 31
        %s938 = smul.addr %s937, 8
        %s939 = scalar_lea.vmem %s7, %s938
      $region60: #{tpu_custom_call.1} parent=55 // pred_fallthru
        _
    $region56: #{tpu_custom_call.1} parent=5 // pred_fallthru
      _
  $region6: #{tpu_custom_call.1} parent=0 // loop_footer
    %s17 = sadd.s32 1, %s13
  $region7: #{tpu_custom_call.1} parent=0 // loop_footer_branch
    %12 = sbr.rel target = $region3
  $region8: #{tpu_custom_call.1} parent=0 // loop_exit
    _

</llo_original>
